<compile_context>
chip_gen: v7x
topology: tpu7x:2x2x1
jax: 0.10.0
libtpu: 0.0.40
codegen_flags: <defaults>
</compile_context>

<pallas_src>
import math

import jax
import jax.numpy as jnp
import numpy as np
from jax.experimental import pallas as pl
from jax.experimental.pallas import tpu as pltpu


# ----------------------------------------------------------------------------
# Pallas kernel
# ----------------------------------------------------------------------------
def _decoder_kernel(x_ref, w_ref, b_ref, o_ref):
    """Fused 1x1 conv + bias + log_softmax over classes for one (n, t) tile.

    x_ref: (1, C, tT)  w_ref: (ncls, C)  b_ref: (ncls, 1)  o_ref: (1, ncls, tT)
    """
    xv = x_ref[0]                                       # (C, tT)
    wv = w_ref[...]                                     # (ncls, C)
    # 1x1 conv == channel contraction on the MXU, f32 accumulation.
    logits = jnp.dot(wv, xv, preferred_element_type=jnp.float32)   # (ncls, tT)
    logits = logits + b_ref[...]                        # broadcast over lanes
    # log-softmax over the class (sublane) axis, kept in f32.
    m = jnp.max(logits, axis=0, keepdims=True)          # (1, tT)
    shifted = logits - m
    lse = jnp.log(jnp.sum(jnp.exp(shifted), axis=0, keepdims=True))
    o_ref[0] = (shifted - lse).astype(o_ref.dtype)


def _pick_time_tile(T, max_tile=512):
    """Largest lane-dense tile (multiple of 128) dividing T, else full T."""
    cand = max_tile
    while cand >= 128:
        if T % cand == 0:
            return cand
        cand //= 2
    return T   # small / odd T: single full-length tile (full-dim block is legal)


def jasper_decoder_forward(enc_out, params):
    """enc_out: list of (N, C, T) arrays (uses enc_out[-1], like the module).

    Returns (N, T, n_classes) log-probabilities.
    """
    x = enc_out[-1]                                     # (N, C, T)
    w = params['w'].astype(x.dtype)                     # (ncls, C)
    b = params['b']                                     # (ncls,)
    N, C, T = x.shape
    ncls = w.shape[0]

    tT = _pick_time_tile(T)
    grid = (N, T // tT)
    b2 = b.reshape(ncls, 1).astype(jnp.float32)         # bias kept in f32

    itemsize = jnp.dtype(x.dtype).itemsize
    cost = pl.CostEstimate(
        flops=2 * N * T * C * ncls,
        transcendentals=N * T * ncls,
        bytes_accessed=(x.size * itemsize + w.size * itemsize
                        + b2.size * 4 + N * ncls * T * itemsize),
    )

    out_nkt = pl.pallas_call(
        _decoder_kernel,
        out_shape=jax.ShapeDtypeStruct((N, ncls, T), x.dtype),
        grid=grid,
        in_specs=[
            pl.BlockSpec((1, C, tT), lambda n, t: (n, 0, t)),
            pl.BlockSpec((ncls, C), lambda n, t: (0, 0)),
            pl.BlockSpec((ncls, 1), lambda n, t: (0, 0)),
        ],
        out_specs=pl.BlockSpec((1, ncls, tT), lambda n, t: (n, 0, t)),
        compiler_params=pltpu.CompilerParams(
            dimension_semantics=("parallel", "parallel")),
        cost_estimate=cost,
    )(x, w, b2)

    # Small output tensor; transpose to the PyTorch layout (N, T, n_classes).
    return jnp.transpose(out_nkt, (0, 2, 1))


# ----------------------------------------------------------------------------
# Pure-JAX reference (same math, no Pallas) -- correctness check only.
# ----------------------------------------------------------------------------
def jasper_decoder_forward_ref(enc_out, params):
    x = enc_out[-1].astype(jnp.float32)                 # (N, C, T)
    w = params['w'].astype(jnp.float32)
    b = params['b'].astype(jnp.float32)
    logits = jnp.einsum('nct,kc->ntk', x, w) + b        # (N, T, ncls)
    return jax.nn.log_softmax(logits, axis=-1).astype(enc_out[-1].dtype)


# ----------------------------------------------------------------------------
# Parameter construction (mirrors nn.Conv1d(in_feats, n_classes, 1, bias=True)
# with xavier_uniform weight init from init_weights; bias keeps the default
# PyTorch Conv1d init).
# ----------------------------------------------------------------------------
def build_jasper_decoder_params(key, in_feats, n_classes):
    kw, kb = jax.random.split(key)
    ksz = 1
    fan_in = in_feats * ksz
    fan_out = n_classes * ksz
    bound = math.sqrt(6.0 / (fan_in + fan_out))         # xavier_uniform, gain=1
    # torch weight shape (n_classes, in_feats, 1) -> squeeze kernel dim.
    w = jax.random.uniform(kw, (n_classes, in_feats), jnp.float32, -bound, bound)
    bbound = 1.0 / math.sqrt(fan_in)                    # default Conv1d bias init
    b = jax.random.uniform(kb, (n_classes,), jnp.float32, -bbound, bbound)
    return {'w': w, 'b': b}


# ----------------------------------------------------------------------------
if __name__ == "__main__":
    key = jax.random.PRNGKey(0)
    N, in_feats, T, n_classes = 2, 32, 16, 29

    kp, kx = jax.random.split(key)
    params = build_jasper_decoder_params(kp, in_feats, n_classes)
    enc_final = jax.random.normal(kx, (N, in_feats, T), jnp.float32)
    enc_out = [enc_final]            # module's forward takes the encoder list

    out = jasper_decoder_forward(enc_out, params)
    out = jax.block_until_ready(out)
    assert out.shape == (N, T, n_classes), out.shape

    # Correctness check against the pure-JAX reference.
    ref = jasper_decoder_forward_ref(enc_out, params)
    np.testing.assert_allclose(np.asarray(out), np.asarray(ref),
                               rtol=1e-5, atol=1e-5)
    # log-probs must exponentiate to a distribution over classes.
    np.testing.assert_allclose(np.exp(np.asarray(out)).sum(-1),
                               np.ones((N, T)), rtol=1e-4, atol=1e-4)

    print("KERNEL_OK")
</pallas_src>

<mosaic_0001>
module attributes {stable_mosaic.version = 11 : i64} {
  func.func @_decoder_kernel(%arg0: i32, %arg1: i32, %arg2: memref<1x32x16xf32, #tpu.memory_space<vmem>>, %arg3: memref<29x32xf32, #tpu.memory_space<vmem>>, %arg4: memref<29x1xf32, #tpu.memory_space<vmem>>, %arg5: memref<1x29x16xf32, #tpu.memory_space<vmem>>) attributes {dimension_semantics = [#tpu.dimension_semantics<parallel>, #tpu.dimension_semantics<parallel>], iteration_bounds = array<i64: 2, 1>, scalar_prefetch = 0 : i64, scratch_operands = 0 : i64, tpu.core_type = #tpu.core_type<tc>, window_params = [{transform_indices = @transform_0, window_bounds = array<i64: 1, 32, 16>}, {pipeline_mode = #tpu.pipeline_mode<synchronous>, transform_indices = @transform_1, window_bounds = array<i64: 29, 32>}, {pipeline_mode = #tpu.pipeline_mode<synchronous>, transform_indices = @transform_2, window_bounds = array<i64: 29, 1>}, {transform_indices = @transform_3, window_bounds = array<i64: 1, 29, 16>}]} {
    %c0 = arith.constant 0 : index
    %c0_0 = arith.constant 0 : index
    %c0_1 = arith.constant 0 : index
    %0 = vector.load %arg2[%c0, %c0_0, %c0_1] : memref<1x32x16xf32, #tpu.memory_space<vmem>>, vector<1x32x16xf32>
    %1 = vector.shape_cast %0 : vector<1x32x16xf32> to vector<32x16xf32>
    %c0_2 = arith.constant 0 : index
    %c0_3 = arith.constant 0 : index
    %2 = vector.load %arg3[%c0_2, %c0_3] : memref<29x32xf32, #tpu.memory_space<vmem>>, vector<29x32xf32>
    %cst = arith.constant dense<0.000000e+00> : vector<29x16xf32>
    %3 = tpu.matmul %2, %1, %cst {dimension_numbers = #tpu.dot_dimension_numbers<[1], [0], [0], [1], [0, 0, 1, 1], [], []>} : vector<29x32xf32>, vector<32x16xf32>, vector<29x16xf32> -> vector<29x16xf32>
    %c0_4 = arith.constant 0 : index
    %c0_5 = arith.constant 0 : index
    %4 = vector.load %arg4[%c0_4, %c0_5] : memref<29x1xf32, #tpu.memory_space<vmem>>, vector<29x1xf32>
    %5 = vector.broadcast %4 : vector<29x1xf32> to vector<29x16xf32>
    %6 = arith.addf %3, %5 : vector<29x16xf32>
    %cst_6 = arith.constant dense<0xFF800000> : vector<16xf32>
    %7 = vector.multi_reduction <maximumf>, %6, %cst_6 [0] : vector<29x16xf32> to vector<16xf32>
    %8 = vector.shape_cast %7 : vector<16xf32> to vector<1x16xf32>
    %9 = vector.broadcast %8 : vector<1x16xf32> to vector<29x16xf32>
    %10 = arith.subf %6, %9 : vector<29x16xf32>
    %11 = math.exp %10 : vector<29x16xf32>
    %cst_7 = arith.constant dense<0.000000e+00> : vector<16xf32>
    %12 = vector.multi_reduction <add>, %11, %cst_7 [0] : vector<29x16xf32> to vector<16xf32>
    %13 = vector.shape_cast %12 : vector<16xf32> to vector<1x16xf32>
    %14 = math.log %13 : vector<1x16xf32>
    %15 = vector.broadcast %14 : vector<1x16xf32> to vector<29x16xf32>
    %16 = arith.subf %10, %15 : vector<29x16xf32>
    %c0_8 = arith.constant 0 : index
    %c0_9 = arith.constant 0 : index
    %c0_10 = arith.constant 0 : index
    %17 = vector.load %arg5[%c0_8, %c0_9, %c0_10] : memref<1x29x16xf32, #tpu.memory_space<vmem>>, vector<1x29x16xf32>
    %18 = vector.shape_cast %17 : vector<1x29x16xf32> to vector<29x16xf32>
    %19 = vector.shape_cast %16 : vector<29x16xf32> to vector<1x29x16xf32>
    tpu.vector_store %arg5[%c0_8, %c0_9, %c0_10], %19 {strides = array<i32>} : memref<1x29x16xf32, #tpu.memory_space<vmem>>, vector<1x29x16xf32>,
    return
  }
  func.func @transform_0(%arg0: i32, %arg1: i32) -> (i32, i32, i32) {
    %c0_i32 = arith.constant 0 : i32
    %c0_i32_0 = arith.constant 0 : i32
    return %arg0, %c0_i32, %arg1 : i32, i32, i32
  }
  func.func @transform_1(%arg0: i32, %arg1: i32) -> (i32, i32) {
    %c0_i32 = arith.constant 0 : i32
    %c0_i32_0 = arith.constant 0 : i32
    %c0_i32_1 = arith.constant 0 : i32
    return %c0_i32, %c0_i32_0 : i32, i32
  }
  func.func @transform_2(%arg0: i32, %arg1: i32) -> (i32, i32) {
    %c0_i32 = arith.constant 0 : i32
    %c0_i32_0 = arith.constant 0 : i32
    %c0_i32_1 = arith.constant 0 : i32
    return %c0_i32, %c0_i32_0 : i32, i32
  }
  func.func @transform_3(%arg0: i32, %arg1: i32) -> (i32, i32, i32) {
    %c0_i32 = arith.constant 0 : i32
    %c0_i32_0 = arith.constant 0 : i32
    return %arg0, %c0_i32, %arg1 : i32, i32, i32
  }
}

</mosaic_0001>

<llo_original>
// kernel: tpu_custom_call.1
$region0: #{tpu_custom_call.1}
  #allocation0 [shape = 'u32[]', space=smem, size = 0x4, offset = 0x4, fixed_abs, tag = 'smem constant byte address 0x4 - core index']
  #allocation1 [shape = 'u32[144,128]{1,0:T(1,128)}', space=vmem, size = 0x12000, scoped, tag = 'internal scratch']
  %s0 = inlined_call_operand.vmem [shape: f32[2,32,16], index: 0, kind: input, shape index: {}]
  %s1 = inlined_call_operand.vmem [shape: f32[29,32], index: 1, kind: input, shape index: {}]
  %s2 = inlined_call_operand.vmem [shape: f32[29,1], index: 2, kind: input, shape index: {}]
  %s3 = inlined_call_operand.vmem [shape: f32[2,29,16], index: 3, kind: output, shape index: {}]
  %s4 = sld [smem:[#allocation0]]
  $region45: #{tpu_custom_call.1} parent=0
    _
  %s6 = ssub.s32 1, %s4
  %s7 = scalar_select 0, %s6, %s4
  loop: start=0, step=1, limit=4
  $region2: #{tpu_custom_call.1} parent=0 // loop_pre_header
    _
  $region3: #{tpu_custom_call.1} parent=0 // loop_header
    %s9 = sphi 0, %s13
    %p10 = scmp.ge.s32.totalorder %s9, 4
    %s16 = sphi 0, %s28
    %s17 = sphi 0, %s24
    %s18 = sphi 0, %s16
    %s19 = sphi 0, %s17
    %s20 = sphi 0, %s18
    %s21 = sphi 0, %s19
    %s33 = sphi 0, %s35
    %s36 = sphi 0, %s33
    %s37 = sphi 0, %s36
    %s53 = sphi 0, %s37
    %s57 = sphi 0, %s57
    %s59 = sphi 0, %s57
    %s60 = sphi 0, %s59
    %s74 = sphi 0, %s60
    %s78 = sphi 0, %s78
    %s80 = sphi 0, %s78
    %s81 = sphi 0, %s80
    %s95 = sphi 0, %s81
    %s103 = sphi 0, %s105
    %s106 = sphi 0, %s103
    %s107 = sphi 0, %s106
    %s123 = sphi 0, %s107
  $region4: #{tpu_custom_call.1} parent=0 // loop_header_branch
    %12 = sbr.rel (%p10) target = $region8
  $region5: #{tpu_custom_call.1} parent=0 // loop_body
    %s14 = ssub.s32 %s9, 1
    %s15 = ssub.s32 %s9, 2
    %s22 = sadd.s32 1, %s17
    %p23 = scmp.ge.s32.totalorder %s22, 1
    %s24 = scalar_select %p23, 0, %s22
    %s25 = sadd.s32 1, %s16
    %s26 = scalar_select %p23, %s25, %s16
    %p27 = scmp.ge.s32.totalorder %s26, 2
    %s28 = scalar_select %p27, 0, %s26
    %s29 = ssub.s32 %s16, %s28
    %s30 = ssub.s32 %s17, %s24
    %s31 = sor.u32 %s29, %s30
    %p32 = scmp.eq.s32.totalorder %s31, 0
    %s34 = sadd.s32 %s33, 1
    %s35 = scalar_select %p32, %s33, %s34
    %p38 = pneg %p32
    %p39 = scmp.eq.s32.totalorder %s9, 1
    %p40 = por %p38, %p39
    %p41 = scmp.ne.s32.totalorder %s33, %s36
    %p42 = scmp.eq.s32.totalorder %s9, 0
    %p43 = por %p41, %p42
    %p44 = scmp.ne.s32.totalorder %s33, %s36
    %p45 = scmp.eq.s32.totalorder %s14, 1
    %p46 = por %p44, %p45
    %p47 = scmp.ne.s32.totalorder %s36, %s37
    %p48 = scmp.eq.s32.totalorder %s14, 0
    %p49 = por %p47, %p48
    %p50 = scmp.ne.s32.totalorder %s36, %s37
    %p51 = scmp.eq.s32.totalorder %s15, 1
    %p52 = por %p50, %p51
    %p54 = scmp.ne.s32.totalorder %s37, %s53
    %p55 = scmp.eq.s32.totalorder %s15, 0
    %p56 = por %p54, %p55
    %s58 = sadd.s32 %s57, 1
    %p61 = scmp.eq.s32.totalorder %s9, 1
    %p62 = scmp.ne.s32.totalorder %s57, %s59
    %p63 = scmp.eq.s32.totalorder %s9, 0
    %p64 = por %p62, %p63
    %p65 = scmp.ne.s32.totalorder %s57, %s59
    %p66 = scmp.eq.s32.totalorder %s14, 1
    %p67 = por %p65, %p66
    %p68 = scmp.ne.s32.totalorder %s59, %s60
    %p69 = scmp.eq.s32.totalorder %s14, 0
    %p70 = por %p68, %p69
    %p71 = scmp.ne.s32.totalorder %s59, %s60
    %p72 = scmp.eq.s32.totalorder %s15, 1
    %p73 = por %p71, %p72
    %p75 = scmp.ne.s32.totalorder %s60, %s74
    %p76 = scmp.eq.s32.totalorder %s15, 0
    %p77 = por %p75, %p76
    %s79 = sadd.s32 %s78, 1
    %p82 = scmp.eq.s32.totalorder %s9, 1
    %p83 = scmp.ne.s32.totalorder %s78, %s80
    %p84 = scmp.eq.s32.totalorder %s9, 0
    %p85 = por %p83, %p84
    %p86 = scmp.ne.s32.totalorder %s78, %s80
    %p87 = scmp.eq.s32.totalorder %s14, 1
    %p88 = por %p86, %p87
    %p89 = scmp.ne.s32.totalorder %s80, %s81
    %p90 = scmp.eq.s32.totalorder %s14, 0
    %p91 = por %p89, %p90
    %p92 = scmp.ne.s32.totalorder %s80, %s81
    %p93 = scmp.eq.s32.totalorder %s15, 1
    %p94 = por %p92, %p93
    %p96 = scmp.ne.s32.totalorder %s81, %s95
    %p97 = scmp.eq.s32.totalorder %s15, 0
    %p98 = por %p96, %p97
    %s99 = ssub.s32 %s16, %s28
    %s100 = ssub.s32 %s17, %s24
    %s101 = sor.u32 %s99, %s100
    %p102 = scmp.eq.s32.totalorder %s101, 0
    %s104 = sadd.s32 %s103, 1
    %s105 = scalar_select %p102, %s103, %s104
    %p108 = pneg %p102
    %p109 = scmp.eq.s32.totalorder %s9, 1
    %p110 = por %p108, %p109
    %p111 = scmp.ne.s32.totalorder %s103, %s106
    %p112 = scmp.eq.s32.totalorder %s9, 0
    %p113 = por %p111, %p112
    %p114 = scmp.ne.s32.totalorder %s103, %s106
    %p115 = scmp.eq.s32.totalorder %s14, 1
    %p116 = por %p114, %p115
    %p117 = scmp.ne.s32.totalorder %s106, %s107
    %p118 = scmp.eq.s32.totalorder %s14, 0
    %p119 = por %p117, %p118
    %p120 = scmp.ne.s32.totalorder %s106, %s107
    %p121 = scmp.eq.s32.totalorder %s15, 1
    %p122 = por %p120, %p121
    %p124 = scmp.ne.s32.totalorder %s107, %s123
    %p125 = scmp.eq.s32.totalorder %s15, 0
    %p126 = por %p124, %p125
    %p127 = scmp.le.s32.totalorder 1, %s9
    %p128 = scmp.lt.s32.totalorder %s9, 3
    %p129 = pnand %p127, %p128
    %p130 = pneg %p129
    // Predicated region
    $region9: #{tpu_custom_call.1} parent=5 // pred_check
      _
    $region10: #{tpu_custom_call.1} parent=5 // pred_check_branch
      %132 = sbr.rel (%p129) target = $region12
    $region11: #{tpu_custom_call.1} parent=5 // pred_region
      %s133 = ssub.s32 %s9, 1
      // Predicated region
      $region13: #{tpu_custom_call.1} parent=11 // pred_check
        %p134 = pneg %p70
      $region14: #{tpu_custom_call.1} parent=11 // pred_check_branch
        %136 = sbr.rel (%p134) target = $region16
      $region15: #{tpu_custom_call.1} parent=11 // pred_region
        _
      $region16: #{tpu_custom_call.1} parent=11 // pred_fallthru
        _
      // Predicated region
      $region17: #{tpu_custom_call.1} parent=11 // pred_check
        %p137 = pneg %p91
      $region18: #{tpu_custom_call.1} parent=11 // pred_check_branch
        %139 = sbr.rel (%p137) target = $region20
      $region19: #{tpu_custom_call.1} parent=11 // pred_region
        _
      $region20: #{tpu_custom_call.1} parent=11 // pred_fallthru
        _
    $region12: #{tpu_custom_call.1} parent=5 // pred_fallthru
      _
    %p140 = scmp.lt.s32.totalorder %s9, 2
    // Predicated region
    $region21: #{tpu_custom_call.1} parent=5 // pred_check
      %p141 = pneg %p140
    $region22: #{tpu_custom_call.1} parent=5 // pred_check_branch
      %143 = sbr.rel (%p141) target = $region24
    $region23: #{tpu_custom_call.1} parent=5 // pred_region
      // Predicated region
      $region25: #{tpu_custom_call.1} parent=23 // pred_check
        %p144 = pneg %p43
      $region26: #{tpu_custom_call.1} parent=23 // pred_check_branch
        %146 = sbr.rel (%p144) target = $region28
      $region27: #{tpu_custom_call.1} parent=23 // pred_region
        %p147 = scmp.lt.s32.totalorder %s16, 1
        %s148 = scalar_select %p147, %s16, 1
        %p149 = scmp.lt.s32.totalorder %s17, 0
        %s150 = scalar_select %p149, %s17, 0
        %s151 = smul.addr %s148, 4
        %s152 = sadd.s32 %s150, %s151
        %s153 = smul.addr %s152, 8
        %s154 = scalar_lea.vmem %s0, %s153
      $region28: #{tpu_custom_call.1} parent=23 // pred_fallthru
        _
    $region24: #{tpu_custom_call.1} parent=5 // pred_fallthru
      _
    %p155 = scmp.le.s32.totalorder 1, %s9
    %p156 = scmp.lt.s32.totalorder %s9, 3
    %p157 = pnand %p155, %p156
    %p158 = pneg %p157
    // Predicated region
    $region29: #{tpu_custom_call.1} parent=5 // pred_check
      _
    $region30: #{tpu_custom_call.1} parent=5 // pred_check_branch
      %160 = sbr.rel (%p157) target = $region32
    $region31: #{tpu_custom_call.1} parent=5 // pred_region
      %s161 = ssub.s32 %s9, 1
      %p162 = scmp.lt.s32.totalorder %s18, 1
      %s163 = scalar_select %p162, %s18, 1
      %p164 = scmp.lt.s32.totalorder %s19, 0
      %s165 = scalar_select %p164, %s19, 0
      %s166 = smul.addr %s163, 4
      %s167 = sadd.s32 %s165, %s166
      %s168 = smul.addr %s167, 8
      %s169 = scalar_lea.vmem %s0, %s168
      %p170 = pneg %p49
      %p171 = pneg %p46
      %p172 = pneg %p70
      %p173 = pneg %p67
      %p174 = pneg %p91
      %p175 = pneg %p88
      %p176 = pneg %p119
      %p177 = pneg %p116
      %p178 = scmp.lt.s32.totalorder %s18, 1
      %s179 = scalar_select %p178, %s18, 1
      %p180 = scmp.lt.s32.totalorder %s19, 0
      %s181 = scalar_select %p180, %s19, 0
      %s182 = smul.addr %s179, 4
      %s183 = sadd.s32 %s181, %s182
      %s184 = smul.addr %s183, 8
      %s185 = scalar_lea.vmem %s3, %s184
      %p186 = scmp.lt.s32.totalorder %s18, 1
      %s187 = scalar_select %p186, %s18, 1
      %p188 = scmp.lt.s32.totalorder %s19, 0
      %s189 = scalar_select %p188, %s19, 0
      %s190 = smul.addr %s187, 4
      %s191 = sadd.s32 %s189, %s190
      %s192 = smul.addr %s191, 8
      %s193 = scalar_lea.vmem %s0, %s192
      %p194 = scmp.lt.s32.totalorder %s18, 1
      %s195 = scalar_select %p194, %s18, 1
      %p196 = scmp.lt.s32.totalorder %s19, 0
      %s197 = scalar_select %p196, %s19, 0
      %s198 = smul.addr %s195, 4
      %s199 = sadd.s32 %s197, %s198
      %s200 = smul.addr %s199, 8
      %s201 = scalar_lea.vmem %s3, %s200
      %v202 = vld [vmem:[%s193] sm:$0xff]
      %v203 = vld [vmem:[%s193 + $0x8] sm:$0xff]
      %v204 = vld [vmem:[%s193 + $0x10] sm:$0xff]
      %v205 = vld [vmem:[%s193 + $0x18] sm:$0xff]
      %v206 = vld [vmem:[%s1] sm:$0xff]
      %v207 = vld [vmem:[%s1 + $0x8] sm:$0xff]
      %v208 = vld [vmem:[%s1 + $0x10] sm:$0xff]
      %v209 = vld [vmem:[%s1 + $0x18] sm:$0x1f]
      %v210 = vld [vmem:[%s2] sm:$0xff]
      %v211 = vld [vmem:[%s2 + $0x8] sm:$0xff]
      %v212 = vld [vmem:[%s2 + $0x10] sm:$0xff]
      %v213 = vld [vmem:[%s2 + $0x18] sm:$0x1f]
      %215 = vset.pattern.permute.xlu0 0
      %216 = vperm.xlu0 %215, %v210
      %v217 = vpop.permute.xlu0 %216
      %220 = vset.pattern.permute.xlu0 0
      %221 = vperm.xlu0 %220, %v211
      %v222 = vpop.permute.xlu0 %221
      %225 = vset.pattern.permute.xlu0 0
      %226 = vperm.xlu0 %225, %v212
      %v227 = vpop.permute.xlu0 %226
      %230 = vset.pattern.permute.xlu0 0
      %231 = vperm.xlu0 %230, %v213
      %v232 = vpop.permute.xlu0 %231
      %vm234 = vcmask 261120
      %v236 = vsel %vm234, %v206, 0
      %v239 = vsel %vm234, %v207, 0
      %v242 = vsel %vm234, %v208, 0
      %v245 = vsel %vm234, %v209, 0
      %247 = vmatprep.subr.mxu0 0.0
      %248 = vmatpush1.msra.mxu0 %v202
      %249 = vmatprep.subr.mxu0 0.0
      %250 = vmatpush1.msra.mxu0 %v203
      %251 = vmatprep.subr.mxu0 0.0
      %252 = vmatpush1.msra.mxu0 %v204
      %253 = vmatprep.subr.mxu0 0.0
      %254 = vmatpush1.msra.mxu0 %v205
      %255 = vmatprep.subr.mxu0 0.0
      %256 = vmatpush1.msra.mxu0 0.0
      %257 = vmatprep.subr.mxu0 0.0
      %258 = vmatpush1.msra.mxu0 0.0
      %259 = vmatprep.subr.mxu0 0.0
      %260 = vmatpush1.msra.mxu0 0.0
      %261 = vmatprep.subr.mxu0 0.0
      %262 = vmatpush1.msra.mxu0 0.0
      %263 = vmatprep.subr.mxu0 0.0
      %264 = vmatpush1.msra.mxu0 0.0
      %265 = vmatprep.subr.mxu0 0.0
      %266 = vmatpush1.msra.mxu0 0.0
      %267 = vmatprep.subr.mxu0 0.0
      %268 = vmatpush1.msra.mxu0 0.0
      %269 = vmatprep.subr.mxu0 0.0
      %270 = vmatpush1.msra.mxu0 0.0
      %271 = vmatprep.subr.mxu0 0.0
      %272 = vmatpush1.msra.mxu0 0.0
      %273 = vmatprep.subr.mxu0 0.0
      %274 = vmatpush1.msra.mxu0 0.0
      %275 = vmatprep.subr.mxu0 0.0
      %276 = vmatpush1.msra.mxu0 0.0
      %277 = vmatprep.subr.mxu0 0.0
      %278 = vmatpush1.msra.mxu0 0.0
      %279 = vmatprep.subr.mxu0 0.0
      %280 = vmatpush1.msra.mxu0 0.0
      %281 = vmatprep.subr.mxu0 0.0
      %282 = vmatpush1.msra.mxu0 0.0
      %283 = vmatprep.subr.mxu0 0.0
      %284 = vmatpush1.msra.mxu0 0.0
      %285 = vmatprep.subr.mxu0 0.0
      %286 = vmatpush1.msra.mxu0 0.0
      %287 = vmatprep.subr.mxu0 0.0
      %288 = vmatpush1.msra.mxu0 0.0
      %289 = vmatprep.subr.mxu0 0.0
      %290 = vmatpush1.msra.mxu0 0.0
      %291 = vmatprep.subr.mxu0 0.0
      %292 = vmatpush1.msra.mxu0 0.0
      %293 = vmatprep.subr.mxu0 0.0
      %294 = vmatpush1.msra.mxu0 0.0
      %295 = vmatprep.subr.mxu0 0.0
      %296 = vmatpush1.msra.mxu0 0.0
      %297 = vmatprep.subr.mxu0 0.0
      %298 = vmatpush1.msra.mxu0 0.0
      %299 = vmatprep.subr.mxu0 0.0
      %300 = vmatpush1.msra.mxu0 0.0
      %301 = vmatprep.subr.mxu0 0.0
      %302 = vmatpush1.msra.mxu0 0.0
      %303 = vmatprep.subr.mxu0 0.0
      %304 = vmatpush1.msra.mxu0 0.0
      %305 = vmatprep.subr.mxu0 0.0
      %306 = vmatpush1.msra.mxu0 0.0
      %307 = vmatprep.subr.mxu0 0.0
      %308 = vmatpush1.msra.mxu0 0.0
      %309 = vmatprep.subr.mxu0 0.0
      %310 = vmatpush1.msra.mxu0 0.0
      %311 = vmatprep.mubr.f32.mxu0 0.0
      %312 = vmatmul.mubr.f32.gmra.mrb[0].mxu0 %v236
      %v313 = vpop.f32.mrb[0].mxu0
      %v314 = vadd.f32 %v217, %v313
      %v315 = vpop.f32.mrb[0].mxu0
      %316 = vmatprep.mubr.f32.mxu0 0.0
      %317 = vmatmul.mubr.f32.gmra.mrb[0].mxu0 %v239
      %v318 = vpop.f32.mrb[0].mxu0
      %v319 = vadd.f32 %v222, %v318
      %v320 = vpop.f32.mrb[0].mxu0
      %321 = vmatprep.mubr.f32.mxu0 0.0
      %322 = vmatmul.mubr.f32.gmra.mrb[0].mxu0 %v242
      %v323 = vpop.f32.mrb[0].mxu0
      %v324 = vadd.f32 %v227, %v323
      %v325 = vpop.f32.mrb[0].mxu0
      %326 = vmatprep.mubr.f32.mxu0 0.0
      %327 = vmatmul.mubr.f32.gmra.mrb[0].mxu0 %v245
      %v328 = vpop.f32.mrb[0].mxu0
      %v329 = vadd.f32 %v232, %v328
      %v330 = vpop.f32.mrb[0].mxu0
      %331 = vdwg.mxu0
      %vm332 = vcmask 130048
      %v333 = vsel %vm332, %v314, -inf
      %v334 = vsel %vm332, %v319, -inf
      %v335 = vsel %vm332, %v324, -inf
      %vm336 = vcmask 126976
      %v337 = vsel %vm336, %v329, -inf
      %v338 = vmax.f32 %v333, %v334
      %v339 = vmax.f32 %v335, %v337
      %v340 = vmax.f32 %v338, %v339
      %v341 = vrot.slane %v340, 4
      %v342 = vmax.f32 %v340, %v341
      %v343 = vrot.slane %v342, 2
      %v344 = vmax.f32 %v342, %v343
      %v345 = vrot.slane %v344, 1
      %v346 = vmax.f32 %v344, %v345
      %v347 = vsub.f32 %v314, %v346
      %v348 = vsub.f32 %v319, %v346
      %v349 = vsub.f32 %v324, %v346
      %v350 = vsub.f32 %v329, %v346
      %v351 = vmul.f32 %v347, 1.442695
      %v352 = vpow.pop %v351
      %v353 = vmul.f32 %v348, 1.442695
      %v354 = vpow.pop %v353
      %v355 = vmul.f32 %v349, 1.442695
      %v356 = vpow.pop %v355
      %v357 = vmul.f32 %v350, 1.442695
      %v358 = vpow.pop %v357
      %v359 = vsel %vm332, %v352, 0.0
      %v360 = vsel %vm332, %v354, 0.0
      %v361 = vadd.f32 %v359, %v360
      %v362 = vsel %vm332, %v356, 0.0
      %v363 = vadd.f32 %v361, %v362
      %v364 = vsel %vm336, %v358, 0.0
      %v365 = vadd.f32 %v363, %v364
      %v366 = vrot.slane %v365, 4
      %v367 = vadd.f32 %v365, %v366
      %v368 = vrot.slane %v367, 2
      %v369 = vadd.f32 %v367, %v368
      %v370 = vrot.slane %v369, 1
      %v371 = vadd.f32 %v369, %v370
      %v372 = vlog2.pop %v371
      %v373 = vmul.f32 %v372, 0.6931472
      %v374 = vsub.f32 %v347, %v373
      %v375 = vsub.f32 %v348, %v373
      %v376 = vsub.f32 %v349, %v373
      %v377 = vsub.f32 %v350, %v373
      %378 = vst.msk [vmem:[%s201] sm:$0xff] %vm332, %v374
      %379 = vst.msk [vmem:[%s201 + $0x8] sm:$0xff] %vm332, %v375
      %380 = vst.msk [vmem:[%s201 + $0x10] sm:$0xff] %vm332, %v376
      %381 = vst.msk [vmem:[%s201 + $0x18] sm:$0x1f] %vm336, %v377
      %p382 = scmp.lt.s32.totalorder %s18, 1
      %s383 = scalar_select %p382, %s18, 1
      %p384 = scmp.lt.s32.totalorder %s19, 0
      %s385 = scalar_select %p384, %s19, 0
      %s386 = smul.addr %s383, 4
      %s387 = sadd.s32 %s385, %s386
      %s388 = smul.addr %s387, 8
      %s389 = scalar_lea.vmem %s3, %s388
      // Predicated region
      $region33: #{tpu_custom_call.1} parent=31 // pred_check
        %p390 = pneg %p116
      $region34: #{tpu_custom_call.1} parent=31 // pred_check_branch
        %392 = sbr.rel (%p390) target = $region36
      $region35: #{tpu_custom_call.1} parent=31 // pred_region
        _
      $region36: #{tpu_custom_call.1} parent=31 // pred_fallthru
        _
    $region32: #{tpu_custom_call.1} parent=5 // pred_fallthru
      _
    %p393 = scmp.le.s32.totalorder 2, %s9
    // Predicated region
    $region37: #{tpu_custom_call.1} parent=5 // pred_check
      %p394 = pneg %p393
    $region38: #{tpu_custom_call.1} parent=5 // pred_check_branch
      %396 = sbr.rel (%p394) target = $region40
    $region39: #{tpu_custom_call.1} parent=5 // pred_region
      %s397 = ssub.s32 %s9, 2
      // Predicated region
      $region41: #{tpu_custom_call.1} parent=39 // pred_check
        %p398 = pneg %p122
      $region42: #{tpu_custom_call.1} parent=39 // pred_check_branch
        %400 = sbr.rel (%p398) target = $region44
      $region43: #{tpu_custom_call.1} parent=39 // pred_region
        %p401 = scmp.lt.s32.totalorder %s20, 1
        %s402 = scalar_select %p401, %s20, 1
        %p403 = scmp.lt.s32.totalorder %s21, 0
        %s404 = scalar_select %p403, %s21, 0
        %s405 = smul.addr %s402, 4
        %s406 = sadd.s32 %s404, %s405
        %s407 = smul.addr %s406, 8
        %s408 = scalar_lea.vmem %s3, %s407
      $region44: #{tpu_custom_call.1} parent=39 // pred_fallthru
        _
    $region40: #{tpu_custom_call.1} parent=5 // pred_fallthru
      _
  $region6: #{tpu_custom_call.1} parent=0 // loop_footer
    %s13 = sadd.s32 1, %s9
  $region7: #{tpu_custom_call.1} parent=0 // loop_footer_branch
    %8 = sbr.rel target = $region3
  $region8: #{tpu_custom_call.1} parent=0 // loop_exit
    _

</llo_original>
